<compile_context>
chip_gen: v6e
topology: v6e:2x2x1
jax: 0.10.0
libtpu: 0.0.40
codegen_flags: <defaults>
</compile_context>

<pallas_src>
import jax
import jax.numpy as jnp
from jax import lax
from jax.experimental import pallas as pl
from jax.experimental.pallas import tpu as pltpu


# ---------------------------------------------------------------------------
# Tiling knobs
# ---------------------------------------------------------------------------
_MAX_TILE_B = 32768    # max lanes per grid step: f32 (32768, 16) block = 2 MiB,
                       # x2 double-buffered + output + resident weights << 16 MiB
_CHUNK_B = 1024        # in-kernel sub-chunk (bounds vreg live ranges / spills)
_MIN_GRID_STEPS = 4    # >=2 so both v7x TensorCores get work, >=4 so the
                       # per-core DMA/compute pipeline has at least two stages


def _round_up(x: int, m: int) -> int:
    return ((x + m - 1) // m) * m


def _choose_tiling(batch: int):
    """Pick (tile_b, chunk_b, b_pad, grid) for the 1-D batch grid."""
    n_steps = max(_MIN_GRID_STEPS, pl.cdiv(batch, _MAX_TILE_B))
    if n_steps % 2:
        n_steps += 1                      # even split across v7x's 2 TCs
    tile_b = _round_up(pl.cdiv(batch, n_steps), 128)
    if tile_b > _CHUNK_B:
        tile_b = _round_up(tile_b, _CHUNK_B)
        chunk_b = _CHUNK_B
    else:
        chunk_b = tile_b
    b_pad = _round_up(batch, tile_b)      # small (<= grid*chunk) remainder pad
    grid = b_pad // tile_b
    return tile_b, chunk_b, b_pad, grid


def _make_kernel(n_hidden_layers: int, n_chunks: int, chunk_b: int):
    """Fused MLP: n_hidden x (Linear + PReLU) then final Linear.

    z_ref   : (TILE_B, latent_dim)      -- native (batch, feature) layout
    out_ref : (n_predictions, TILE_B)   -- batch on the lane axis (lane-dense)
    """

    def kernel(*refs):
        z_ref = refs[0]
        out_ref = refs[-1]
        hidden = refs[1:1 + 3 * n_hidden_layers]
        w_last_ref = refs[1 + 3 * n_hidden_layers]
        b_last_ref = refs[2 + 3 * n_hidden_layers]

        def chunk_body(c, carry):
            start = pl.multiple_of(c * chunk_b, chunk_b)
            # (chunk_b, latent_dim): batch on sublanes, exactly as stored in HBM.
            h = z_ref[pl.ds(start, chunk_b), :].astype(jnp.float32)

            batch_on_sublanes = True
            for l in range(n_hidden_layers):
                w_ref = hidden[3 * l]
                b_ref = hidden[3 * l + 1]
                a_ref = hidden[3 * l + 2]
                if batch_on_sublanes:
                    # (out, in) . (chunk, in) -> (out, chunk): the batch->lanes
                    # flip is folded into the contraction (no transpose op).
                    h = lax.dot_general(
                        w_ref[...], h, (((1,), (1,)), ((), ())),
                        preferred_element_type=jnp.float32)
                    batch_on_sublanes = False
                else:
                    h = jnp.dot(w_ref[...], h,
                                preferred_element_type=jnp.float32)
                h = h + b_ref[...]            # bias (out, 1) broadcasts on lanes
                a = a_ref[0]                  # shared PReLU slope (SMEM scalar)
                h = jnp.where(h >= 0.0, h, a * h)

            if batch_on_sublanes:             # n_layers == 1: no hidden layers
                y = lax.dot_general(
                    w_last_ref[...], h, (((1,), (1,)), ((), ())),
                    preferred_element_type=jnp.float32)
            else:
                y = jnp.dot(w_last_ref[...], h,
                            preferred_element_type=jnp.float32)
            y = y + b_last_ref[...]
            out_ref[:, pl.ds(start, chunk_b)] = y.astype(out_ref.dtype)
            return carry

        lax.fori_loop(0, n_chunks, chunk_body, 0, unroll=True)

    return kernel


def init_ultra_predictor_params(key, latent_dim=16, n_layers=2, n_predictions=2):
    """Parameters in PyTorch-native layout.

    hidden layers: (W [out, in], b [out, 1], alpha [1])  (alpha = PReLU slope)
    final layer:   (W [out, in], b [out, 1])
    """
    assert n_layers >= 1 and n_predictions >= 1 and latent_dim >= 1
    assert latent_dim % (2 ** (n_layers - 1)) == 0

    params = []
    dim = latent_dim
    for _ in range(n_layers - 1):
        key, kw, kb = jax.random.split(key, 3)
        out_dim = dim // 2
        bound = 1.0 / float(dim) ** 0.5
        w = jax.random.uniform(kw, (out_dim, dim), jnp.float32, -bound, bound)
        b = jax.random.uniform(kb, (out_dim, 1), jnp.float32, -bound, bound)
        alpha = jnp.full((1,), 0.2, jnp.float32)   # nn.PReLU(init=0.2)
        params.append((w, b, alpha))
        dim = out_dim

    key, kw, kb = jax.random.split(key, 3)
    bound = 1.0 / float(dim) ** 0.5
    w = jax.random.uniform(kw, (n_predictions, dim), jnp.float32, -bound, bound)
    b = jax.random.uniform(kb, (n_predictions, 1), jnp.float32, -bound, bound)
    params.append((w, b))
    return params


@jax.jit
def ultra_predictor_forward(z, params):
    """Fused UltraPredictor forward: z (B, latent_dim) -> (B, n_predictions)."""
    n_hidden = len(params) - 1
    B, latent_dim = z.shape
    n_predictions = params[-1][0].shape[0]

    tile_b, chunk_b, b_pad, grid = _choose_tiling(B)
    n_chunks = tile_b // chunk_b

    # z stays in its native layout; pad the batch only if the tile doesn't
    # divide it (small remainder copy, zero cost for "nice" batch sizes).
    z_in = z if b_pad == B else jnp.pad(z, ((0, b_pad - B), (0, 0)))

    flat_inputs = [z_in]
    in_specs = [pl.BlockSpec((tile_b, latent_dim), lambda i: (i, 0))]
    for (w, b, alpha) in params[:-1]:
        flat_inputs += [w, b, alpha]
        in_specs += [
            pl.BlockSpec(w.shape, lambda i: (0, 0)),                # resident W
            pl.BlockSpec(b.shape, lambda i: (0, 0)),                # resident b
            pl.BlockSpec(memory_space=pltpu.MemorySpace.SMEM),      # PReLU slope
        ]
    w_last, b_last = params[-1]
    flat_inputs += [w_last, b_last]
    in_specs += [
        pl.BlockSpec(w_last.shape, lambda i: (0, 0)),
        pl.BlockSpec(b_last.shape, lambda i: (0, 0)),
    ]

    out_t = pl.pallas_call(
        _make_kernel(n_hidden, n_chunks, chunk_b),
        out_shape=jax.ShapeDtypeStruct((n_predictions, b_pad), z.dtype),
        grid=(grid,),
        in_specs=in_specs,
        out_specs=pl.BlockSpec((n_predictions, tile_b), lambda i: (0, i)),
        compiler_params=pltpu.CompilerParams(
            dimension_semantics=("parallel",),
            vmem_limit_bytes=32 * 1024 * 1024,
        ),
    )(*flat_inputs)

    # NOTE: if the consumer accepts (n_predictions, B), return out_t[:, :B]
    # directly and skip this cheap (8 B/elem) output transpose entirely.
    return out_t[:, :B].T


def _reference_forward(z, params):
    """Plain-JAX reference (same math, feature-last layout)."""
    h = z.astype(jnp.float32)
    for (w, b, alpha) in params[:-1]:
        h = h @ w.T + b[:, 0]
        h = jnp.where(h >= 0.0, h, alpha[0] * h)
    w, b = params[-1]
    return (h @ w.T + b[:, 0]).astype(z.dtype)


if __name__ == "__main__":
    latent_dim = 16
    n_layers = 2
    n_predictions = 2

    key = jax.random.PRNGKey(0)
    key, kz = jax.random.split(key)
    params = init_ultra_predictor_params(
        key, latent_dim=latent_dim, n_layers=n_layers, n_predictions=n_predictions
    )

    # Small shape consistent with the module.
    z_small = jax.random.normal(kz, (8, latent_dim), jnp.float32)
    out = jax.block_until_ready(ultra_predictor_forward(z_small, params))
    ref = _reference_forward(z_small, params)
    assert out.shape == (8, n_predictions), out.shape
    assert jnp.allclose(out, ref, atol=1e-5, rtol=1e-5), "mismatch vs reference (B=8)"

    # Also exercise the multi-step grid + in-kernel chunk loop (still tiny).
    z_big = jax.random.normal(kz, (8192, latent_dim), jnp.float32)
    out_b = jax.block_until_ready(ultra_predictor_forward(z_big, params))
    ref_b = _reference_forward(z_big, params)
    assert out_b.shape == (8192, n_predictions), out_b.shape
    assert jnp.allclose(out_b, ref_b, atol=1e-5, rtol=1e-5), "mismatch vs reference (B=8192)"

    print("KERNEL_OK")
</pallas_src>

<mosaic_0001>
module attributes {stable_mosaic.version = 11 : i64} {
  func.func @kernel(%arg0: i32, %arg1: memref<128x16xf32, #tpu.memory_space<vmem>>, %arg2: memref<8x16xf32, #tpu.memory_space<vmem>>, %arg3: memref<8x1xf32, #tpu.memory_space<vmem>>, %arg4: memref<1xf32, #tpu.memory_space<smem>>, %arg5: memref<2x8xf32, #tpu.memory_space<vmem>>, %arg6: memref<2x1xf32, #tpu.memory_space<vmem>>, %arg7: memref<2x128xf32, #tpu.memory_space<vmem>>) attributes {dimension_semantics = [#tpu.dimension_semantics<parallel>], iteration_bounds = array<i64: 1>, scalar_prefetch = 0 : i64, scratch_operands = 0 : i64, tpu.core_type = #tpu.core_type<tc>, window_params = [{transform_indices = @transform_0, window_bounds = array<i64: 128, 16>}, {pipeline_mode = #tpu.pipeline_mode<synchronous>, transform_indices = @transform_1, window_bounds = array<i64: 8, 16>}, {pipeline_mode = #tpu.pipeline_mode<synchronous>, transform_indices = @transform_2, window_bounds = array<i64: 8, 1>}, {transform_indices = @transform_3, window_bounds = array<i64: 1>}, {pipeline_mode = #tpu.pipeline_mode<synchronous>, transform_indices = @transform_4, window_bounds = array<i64: 2, 8>}, {pipeline_mode = #tpu.pipeline_mode<synchronous>, transform_indices = @transform_5, window_bounds = array<i64: 2, 1>}, {transform_indices = @transform_6, window_bounds = array<i64: 2, 128>}]} {
    %c0_i32 = arith.constant 0 : i32
    %c128_i32 = arith.constant 128 : i32
    %0 = arith.muli %c0_i32, %c128_i32 : i32
    %1 = tpu.assume_multiple %0, 128 : i32
    %2 = arith.index_cast %1 : i32 to index
    %c0 = arith.constant 0 : index
    %3 = vector.load %arg1[%2, %c0] : memref<128x16xf32, #tpu.memory_space<vmem>>, vector<128x16xf32>
    %c0_0 = arith.constant 0 : index
    %c0_1 = arith.constant 0 : index
    %4 = vector.load %arg2[%c0_0, %c0_1] : memref<8x16xf32, #tpu.memory_space<vmem>>, vector<8x16xf32>
    %cst = arith.constant dense<0.000000e+00> : vector<8x128xf32>
    %5 = tpu.matmul %4, %3, %cst {dimension_numbers = #tpu.dot_dimension_numbers<[1], [1], [0], [0], [0, 0, 1, 0], [], []>} : vector<8x16xf32>, vector<128x16xf32>, vector<8x128xf32> -> vector<8x128xf32>
    %c0_2 = arith.constant 0 : index
    %c0_3 = arith.constant 0 : index
    %6 = vector.load %arg3[%c0_2, %c0_3] : memref<8x1xf32, #tpu.memory_space<vmem>>, vector<8x1xf32>
    %7 = vector.broadcast %6 : vector<8x1xf32> to vector<8x128xf32>
    %8 = arith.addf %5, %7 : vector<8x128xf32>
    %c0_4 = arith.constant 0 : index
    %9 = memref.load %arg4[%c0_4] : memref<1xf32, #tpu.memory_space<smem>>
    %cst_5 = arith.constant 0.000000e+00 : f32
    %10 = vector.broadcast %cst_5 : f32 to vector<8x128xf32>
    %11 = arith.cmpf oge, %8, %10 : vector<8x128xf32>
    %12 = vector.broadcast %9 : f32 to vector<8x128xf32>
    %13 = arith.mulf %12, %8 : vector<8x128xf32>
    %14 = arith.select %11, %8, %13 : vector<8x128xi1>, vector<8x128xf32>
    %c0_6 = arith.constant 0 : index
    %c0_7 = arith.constant 0 : index
    %15 = vector.load %arg5[%c0_6, %c0_7] : memref<2x8xf32, #tpu.memory_space<vmem>>, vector<2x8xf32>
    %cst_8 = arith.constant dense<0.000000e+00> : vector<2x128xf32>
    %16 = tpu.matmul %15, %14, %cst_8 {dimension_numbers = #tpu.dot_dimension_numbers<[1], [0], [0], [1], [0, 0, 1, 1], [], []>} : vector<2x8xf32>, vector<8x128xf32>, vector<2x128xf32> -> vector<2x128xf32>
    %c0_9 = arith.constant 0 : index
    %c0_10 = arith.constant 0 : index
    %17 = vector.load %arg6[%c0_9, %c0_10] : memref<2x1xf32, #tpu.memory_space<vmem>>, vector<2x1xf32>
    %18 = vector.broadcast %17 : vector<2x1xf32> to vector<2x128xf32>
    %19 = arith.addf %16, %18 : vector<2x128xf32>
    %c0_11 = arith.constant 0 : index
    %20 = arith.index_cast %1 : i32 to index
    %21 = vector.load %arg7[%c0_11, %20] : memref<2x128xf32, #tpu.memory_space<vmem>>, vector<2x128xf32>
    tpu.vector_store %arg7[%c0_11, %20], %19 {strides = array<i32>} : memref<2x128xf32, #tpu.memory_space<vmem>>, vector<2x128xf32>,
    %c1_i32 = arith.constant 1 : i32
    return
  }
  func.func @transform_0(%arg0: i32) -> (i32, i32) {
    %c0_i32 = arith.constant 0 : i32
    %c0_i32_0 = arith.constant 0 : i32
    return %arg0, %c0_i32 : i32, i32
  }
  func.func @transform_1(%arg0: i32) -> (i32, i32) {
    %c0_i32 = arith.constant 0 : i32
    %c0_i32_0 = arith.constant 0 : i32
    %c0_i32_1 = arith.constant 0 : i32
    return %c0_i32, %c0_i32_0 : i32, i32
  }
  func.func @transform_2(%arg0: i32) -> (i32, i32) {
    %c0_i32 = arith.constant 0 : i32
    %c0_i32_0 = arith.constant 0 : i32
    %c0_i32_1 = arith.constant 0 : i32
    return %c0_i32, %c0_i32_0 : i32, i32
  }
  func.func @transform_3(%arg0: i32) -> i32 {
    %c0_i32 = arith.constant 0 : i32
    %c0_i32_0 = arith.constant 0 : i32
    return %c0_i32 : i32
  }
  func.func @transform_4(%arg0: i32) -> (i32, i32) {
    %c0_i32 = arith.constant 0 : i32
    %c0_i32_0 = arith.constant 0 : i32
    %c0_i32_1 = arith.constant 0 : i32
    return %c0_i32, %c0_i32_0 : i32, i32
  }
  func.func @transform_5(%arg0: i32) -> (i32, i32) {
    %c0_i32 = arith.constant 0 : i32
    %c0_i32_0 = arith.constant 0 : i32
    %c0_i32_1 = arith.constant 0 : i32
    return %c0_i32, %c0_i32_0 : i32, i32
  }
  func.func @transform_6(%arg0: i32) -> (i32, i32) {
    %c0_i32 = arith.constant 0 : i32
    %c0_i32_0 = arith.constant 0 : i32
    return %c0_i32, %arg0 : i32, i32
  }
}

</mosaic_0001>

<llo_original>
// kernel: ultra_predictor_forward.1
$region0: #{ultra_predictor_forward.1}
  #allocation0 [shape = 'u32[]', space=smem, size = 0x4, offset = 0x4, fixed_abs, tag = 'smem constant byte address 0x4 - core index']
  #allocation1 [shape = 'u32[144,128]{1,0:T(1,128)}', space=vmem, size = 0x12000, scoped, tag = 'internal scratch']
  #allocation2 [shape = 'f32[1]{0:T(128)S(6)}', space=smem, size = 0x200, scoped, tag = 'scoped memory for ultra_predictor_forward.1']
  %s0 = inlined_call_operand.vmem [shape: f32[128,16], index: 0, kind: input, shape index: {}]
  %s1 = inlined_call_operand.vmem [shape: f32[8,16], index: 1, kind: input, shape index: {}]
  %s2 = inlined_call_operand.vmem [shape: f32[8,1], index: 2, kind: input, shape index: {}]
  %s3 = inlined_call_operand.<no memory space> [shape: f32[1], index: 3, kind: input, shape index: {}]
  %s4 = inlined_call_operand.vmem [shape: f32[2,8], index: 4, kind: input, shape index: {}]
  %s5 = inlined_call_operand.vmem [shape: f32[2,1], index: 5, kind: input, shape index: {}]
  %s6 = inlined_call_operand.vmem [shape: f32[2,128], index: 6, kind: output, shape index: {}]
  %s7 = sld [smem:[#allocation0]]
  $region34: #{ultra_predictor_forward.1} parent=0
    _
  %s9 = ssub.s32 1, %s7
  %s10 = scalar_select 0, %s9, %s7
  %11 = sst [smem:[#allocation2]] %s3
  // Predicated region
  $region2: #{ultra_predictor_forward.1} parent=0 // pred_check
    _
  $region3: #{ultra_predictor_forward.1} parent=0 // pred_check_branch
    %13 = sbr.rel (0) target = $region5
  $region4: #{ultra_predictor_forward.1} parent=0 // pred_region
    _
  $region5: #{ultra_predictor_forward.1} parent=0 // pred_fallthru
    _
  // Predicated region
  $region6: #{ultra_predictor_forward.1} parent=0 // pred_check
    _
  $region7: #{ultra_predictor_forward.1} parent=0 // pred_check_branch
    %15 = sbr.rel (0) target = $region9
  $region8: #{ultra_predictor_forward.1} parent=0 // pred_region
    _
  $region9: #{ultra_predictor_forward.1} parent=0 // pred_fallthru
    _
  // Predicated region
  $region10: #{ultra_predictor_forward.1} parent=0 // pred_check
    _
  $region11: #{ultra_predictor_forward.1} parent=0 // pred_check_branch
    %17 = sbr.rel (0) target = $region13
  $region12: #{ultra_predictor_forward.1} parent=0 // pred_region
    _
  $region13: #{ultra_predictor_forward.1} parent=0 // pred_fallthru
    _
  // Predicated region
  $region14: #{ultra_predictor_forward.1} parent=0 // pred_check
    _
  $region15: #{ultra_predictor_forward.1} parent=0 // pred_check_branch
    %19 = sbr.rel (0) target = $region17
  $region16: #{ultra_predictor_forward.1} parent=0 // pred_region
    _
  $region17: #{ultra_predictor_forward.1} parent=0 // pred_fallthru
    _
  // Predicated region
  $region18: #{ultra_predictor_forward.1} parent=0 // pred_check
    _
  $region19: #{ultra_predictor_forward.1} parent=0 // pred_check_branch
    %21 = sbr.rel (0) target = $region21
  $region20: #{ultra_predictor_forward.1} parent=0 // pred_region
    _
  $region21: #{ultra_predictor_forward.1} parent=0 // pred_fallthru
    _
  // Predicated region
  $region22: #{ultra_predictor_forward.1} parent=0 // pred_check
    _
  $region23: #{ultra_predictor_forward.1} parent=0 // pred_check_branch
    %23 = sbr.rel (0) target = $region25
  $region24: #{ultra_predictor_forward.1} parent=0 // pred_region
    _
  $region25: #{ultra_predictor_forward.1} parent=0 // pred_fallthru
    _
  %v24 = vld [vmem:[%s0] sm:$0xff]
  %v25 = vld [vmem:[%s0 + $0x8] sm:$0xff]
  %v26 = vld [vmem:[%s0 + $0x10] sm:$0xff]
  %v27 = vld [vmem:[%s0 + $0x18] sm:$0xff]
  %v28 = vld [vmem:[%s0 + $0x20] sm:$0xff]
  %v29 = vld [vmem:[%s0 + $0x28] sm:$0xff]
  %v30 = vld [vmem:[%s0 + $0x30] sm:$0xff]
  %v31 = vld [vmem:[%s0 + $0x38] sm:$0xff]
  %v32 = vld [vmem:[%s0 + $0x40] sm:$0xff]
  %v33 = vld [vmem:[%s0 + $0x48] sm:$0xff]
  %v34 = vld [vmem:[%s0 + $0x50] sm:$0xff]
  %v35 = vld [vmem:[%s0 + $0x58] sm:$0xff]
  %v36 = vld [vmem:[%s0 + $0x60] sm:$0xff]
  %v37 = vld [vmem:[%s0 + $0x68] sm:$0xff]
  %v38 = vld [vmem:[%s0 + $0x70] sm:$0xff]
  %v39 = vld [vmem:[%s0 + $0x78] sm:$0xff]
  %v40 = vld [vmem:[%s1] sm:$0xff]
  %v41 = vld [vmem:[%s2] sm:$0xff]
  %43 = vset.pattern.permute.xlu0 0
  %44 = vperm.xlu0 %43, %v41
  %v45 = vpop.permute.xlu0 %44
  %vm47 = vcmask 130048
  %v49 = vsel %vm47, %v40, 0
  %v52 = vsel %vm47, %v24, 0
  %v55 = vsel %vm47, %v25, 0
  %v58 = vsel %vm47, %v26, 0
  %v61 = vsel %vm47, %v27, 0
  %v64 = vsel %vm47, %v28, 0
  %v67 = vsel %vm47, %v29, 0
  %v70 = vsel %vm47, %v30, 0
  %v73 = vsel %vm47, %v31, 0
  %v76 = vsel %vm47, %v32, 0
  %v79 = vsel %vm47, %v33, 0
  %v82 = vsel %vm47, %v34, 0
  %v85 = vsel %vm47, %v35, 0
  %v88 = vsel %vm47, %v36, 0
  %v91 = vsel %vm47, %v37, 0
  %v94 = vsel %vm47, %v38, 0
  %v97 = vsel %vm47, %v39, 0
  %99 = vmatprep.subr.mxu0 0.0
  %100 = vmatpush1.xpose.msra.mxu0 %v97
  %101 = vmatprep.subr.mxu0 0.0
  %102 = vmatpush1.xpose.msra.mxu0 %v94
  %103 = vmatprep.subr.mxu0 0.0
  %104 = vmatpush1.xpose.msra.mxu0 %v91
  %105 = vmatprep.subr.mxu0 0.0
  %106 = vmatpush1.xpose.msra.mxu0 %v88
  %107 = vmatprep.subr.mxu0 0.0
  %108 = vmatpush1.xpose.msra.mxu0 %v85
  %109 = vmatprep.subr.mxu0 0.0
  %110 = vmatpush1.xpose.msra.mxu0 %v82
  %111 = vmatprep.subr.mxu0 0.0
  %112 = vmatpush1.xpose.msra.mxu0 %v79
  %113 = vmatprep.subr.mxu0 0.0
  %114 = vmatpush1.xpose.msra.mxu0 %v76
  %115 = vmatprep.subr.mxu0 0.0
  %116 = vmatpush1.xpose.msra.mxu0 %v73
  %117 = vmatprep.subr.mxu0 0.0
  %118 = vmatpush1.xpose.msra.mxu0 %v70
  %119 = vmatprep.subr.mxu0 0.0
  %120 = vmatpush1.xpose.msra.mxu0 %v67
  %121 = vmatprep.subr.mxu0 0.0
  %122 = vmatpush1.xpose.msra.mxu0 %v64
  %123 = vmatprep.subr.mxu0 0.0
  %124 = vmatpush1.xpose.msra.mxu0 %v61
  %125 = vmatprep.subr.mxu0 0.0
  %126 = vmatpush1.xpose.msra.mxu0 %v58
  %127 = vmatprep.subr.mxu0 0.0
  %128 = vmatpush1.xpose.msra.mxu0 %v55
  %129 = vmatprep.subr.mxu0 0.0
  %130 = vmatpush1.xpose.msra.mxu0 %v52
  %131 = vmatprep.subr.mxu0 0.0
  %132 = vmatpush2.xpose.msra.mxu0 0.0
  %133 = vmatprep.subr.mxu0 0.0
  %134 = vmatpush2.xpose.msra.mxu0 0.0
  %135 = vmatprep.subr.mxu0 0.0
  %136 = vmatpush2.xpose.msra.mxu0 0.0
  %137 = vmatprep.subr.mxu0 0.0
  %138 = vmatpush2.xpose.msra.mxu0 0.0
  %139 = vmatprep.subr.mxu0 0.0
  %140 = vmatpush2.xpose.msra.mxu0 0.0
  %141 = vmatprep.subr.mxu0 0.0
  %142 = vmatpush2.xpose.msra.mxu0 0.0
  %143 = vmatprep.subr.mxu0 0.0
  %144 = vmatpush2.xpose.msra.mxu0 0.0
  %145 = vmatprep.subr.mxu0 0.0
  %146 = vmatpush2.xpose.msra.mxu0 0.0
  %147 = vmatprep.subr.mxu0 0.0
  %148 = vmatpush2.xpose.msra.mxu0 0.0
  %149 = vmatprep.subr.mxu0 0.0
  %150 = vmatpush2.xpose.msra.mxu0 0.0
  %151 = vmatprep.subr.mxu0 0.0
  %152 = vmatpush2.xpose.msra.mxu0 0.0
  %153 = vmatprep.subr.mxu0 0.0
  %154 = vmatpush2.xpose.msra.mxu0 0.0
  %155 = vmatprep.subr.mxu0 0.0
  %156 = vmatpush2.xpose.msra.mxu0 0.0
  %157 = vmatprep.subr.mxu0 0.0
  %158 = vmatpush2.xpose.msra.mxu0 0.0
  %159 = vmatprep.subr.mxu0 0.0
  %160 = vmatpush2.xpose.msra.mxu0 0.0
  %161 = vmatprep.subr.mxu0 0.0
  %162 = vmatpush2.xpose.msra.mxu0 0.0
  %163 = vmatprep.mubr.f32.mxu0 0.0
  %164 = vmatmul.mubr.f32.gmra.mxu0 %v49
  %v165 = vpop.f32.mrf.mxu0
  %v166 = vadd.f32 %v45, %v165
  %v167 = vpop.f32.mrf.mxu0
  %168 = vdwg.mxu0
  %s169 = sld [smem:[#allocation2]]
  %vm170 = vcmp.ge.f32.partialorder %v166, 0.0
  %v171 = vstv %s169
  %v172 = vmul.f32 %v171, %v166
  %v173 = vsel %vm170, %v166, %v172
  %v174 = vld [vmem:[%s4] sm:$0x3]
  %v175 = vld [vmem:[%s5] sm:$0x3]
  %177 = vset.pattern.permute.xlu0 0
  %178 = vperm.xlu0 %177, %v175
  %v179 = vpop.permute.xlu0 %178
  %vm181 = vcmask 64512
  %v183 = vsel %vm181, %v174, 0
  %185 = vmatprep.subr.mxu0 0.0
  %186 = vmatpush1.msra.mxu0 0.0
  %187 = vmatprep.subr.mxu0 0.0
  %188 = vmatpush1.msra.mxu0 0.0
  %189 = vmatprep.subr.mxu0 0.0
  %190 = vmatpush1.msra.mxu0 0.0
  %191 = vmatprep.subr.mxu0 0.0
  %192 = vmatpush1.msra.mxu0 0.0
  %193 = vmatprep.subr.mxu0 0.0
  %194 = vmatpush1.msra.mxu0 0.0
  %195 = vmatprep.subr.mxu0 0.0
  %196 = vmatpush1.msra.mxu0 0.0
  %197 = vmatprep.subr.mxu0 0.0
  %198 = vmatpush1.msra.mxu0 0.0
  %199 = vmatprep.subr.mxu0 0.0
  %200 = vmatpush1.msra.mxu0 0.0
  %201 = vmatprep.subr.mxu0 0.0
  %202 = vmatpush1.msra.mxu0 0.0
  %203 = vmatprep.subr.mxu0 0.0
  %204 = vmatpush1.msra.mxu0 0.0
  %205 = vmatprep.subr.mxu0 0.0
  %206 = vmatpush1.msra.mxu0 0.0
  %207 = vmatprep.subr.mxu0 0.0
  %208 = vmatpush1.msra.mxu0 0.0
  %209 = vmatprep.subr.mxu0 0.0
  %210 = vmatpush1.msra.mxu0 0.0
  %211 = vmatprep.subr.mxu0 0.0
  %212 = vmatpush1.msra.mxu0 0.0
  %213 = vmatprep.subr.mxu0 0.0
  %214 = vmatpush1.msra.mxu0 0.0
  %215 = vmatprep.subr.mxu0 0.0
  %216 = vmatpush1.msra.mxu0 %v173
  %217 = vmatprep.subr.mxu0 0.0
  %218 = vmatpush2.msra.mxu0 0.0
  %219 = vmatprep.subr.mxu0 0.0
  %220 = vmatpush2.msra.mxu0 0.0
  %221 = vmatprep.subr.mxu0 0.0
  %222 = vmatpush2.msra.mxu0 0.0
  %223 = vmatprep.subr.mxu0 0.0
  %224 = vmatpush2.msra.mxu0 0.0
  %225 = vmatprep.subr.mxu0 0.0
  %226 = vmatpush2.msra.mxu0 0.0
  %227 = vmatprep.subr.mxu0 0.0
  %228 = vmatpush2.msra.mxu0 0.0
  %229 = vmatprep.subr.mxu0 0.0
  %230 = vmatpush2.msra.mxu0 0.0
  %231 = vmatprep.subr.mxu0 0.0
  %232 = vmatpush2.msra.mxu0 0.0
  %233 = vmatprep.subr.mxu0 0.0
  %234 = vmatpush2.msra.mxu0 0.0
  %235 = vmatprep.subr.mxu0 0.0
  %236 = vmatpush2.msra.mxu0 0.0
  %237 = vmatprep.subr.mxu0 0.0
  %238 = vmatpush2.msra.mxu0 0.0
  %239 = vmatprep.subr.mxu0 0.0
  %240 = vmatpush2.msra.mxu0 0.0
  %241 = vmatprep.subr.mxu0 0.0
  %242 = vmatpush2.msra.mxu0 0.0
  %243 = vmatprep.subr.mxu0 0.0
  %244 = vmatpush2.msra.mxu0 0.0
  %245 = vmatprep.subr.mxu0 0.0
  %246 = vmatpush2.msra.mxu0 0.0
  %247 = vmatprep.subr.mxu0 0.0
  %248 = vmatpush2.msra.mxu0 0.0
  %249 = vmatprep.mubr.f32.mxu0 0.0
  %250 = vmatmul.mubr.f32.gmra.mxu0 %v183
  %v251 = vpop.f32.mrf.mxu0
  %v252 = vadd.f32 %v179, %v251
  %v253 = vpop.f32.mrf.mxu0
  %254 = vdwg.mxu0
  %255 = vst [vmem:[%s6] sm:$0x3] %v252
  // Predicated region
  $region26: #{ultra_predictor_forward.1} parent=0 // pred_check
    _
  $region27: #{ultra_predictor_forward.1} parent=0 // pred_check_branch
    %257 = sbr.rel (0) target = $region29
  $region28: #{ultra_predictor_forward.1} parent=0 // pred_region
    _
  $region29: #{ultra_predictor_forward.1} parent=0 // pred_fallthru
    _
  // Predicated region
  $region30: #{ultra_predictor_forward.1} parent=0 // pred_check
    _
  $region31: #{ultra_predictor_forward.1} parent=0 // pred_check_branch
    %259 = sbr.rel (0) target = $region33
  $region32: #{ultra_predictor_forward.1} parent=0 // pred_region
    _
  $region33: #{ultra_predictor_forward.1} parent=0 // pred_fallthru
    _

</llo_original>
